<compile_context>
chip_gen: v6e
topology: v6e:2x2x1
jax: 0.10.0
libtpu: 0.0.40
codegen_flags: <defaults>
</compile_context>

<pallas_src>
import functools

import jax
import jax.numpy as jnp
from jax.experimental import pallas as pl
from jax.experimental.pallas import tpu as pltpu


def _round_up(x, m):
    return ((x + m - 1) // m) * m


def _mlp_kernel(x_ref, w1_ref, b1_ref, w2_ref, b2_ref, w3_ref, b3_ref, out_ref):
    # All three matmuls + ReLUs fused per batch tile; intermediates stay in
    # vregs/VMEM.  Dots use low-precision inputs with f32 accumulation; bias
    # add + ReLU run in f32 on the VPU (v5e-friendly).  Biases are loaded once.
    x = x_ref[...]
    b1 = b1_ref[...]
    b2 = b2_ref[...]
    b3 = b3_ref[...]

    h1 = jnp.dot(x, w1_ref[...], preferred_element_type=jnp.float32) + b1
    h1 = jnp.maximum(h1, 0.0)

    h2 = jnp.dot(h1.astype(w2_ref.dtype), w2_ref[...],
                 preferred_element_type=jnp.float32) + b2
    h2 = jnp.maximum(h2, 0.0)

    out = jnp.dot(h2.astype(w3_ref.dtype), w3_ref[...],
                  preferred_element_type=jnp.float32) + b3
    out_ref[...] = out.astype(out_ref.dtype)


@functools.partial(jax.jit, static_argnames=("block_b", "mxu_dtype"))
def multi_discrete_policy_forward(s, params, *, block_b=512,
                                  mxu_dtype=jnp.bfloat16):
    """a_weights = net(s) via a fused Pallas kernel.

    s: [B, s_dim] float32
    params: w1[s_dim,h], b1[1,h], w2[h,h], b2[1,h], w3[h,a], b3[1,a]
    returns: [B, a_dim] float32
    """
    w1, b1 = params["w1"], params["b1"]
    w2, b2 = params["w2"], params["b2"]
    w3, b3 = params["w3"], params["b3"]

    B, s_dim = s.shape
    h_dim = w1.shape[1]
    a_dim = w3.shape[1]

    # Lane-dense padded dims (last dim multiple of 128).
    s_pad = _round_up(s_dim, 128)
    h_pad = _round_up(h_dim, 128)
    a_pad = _round_up(a_dim, 128)

    # Batch tile: large by default, shrunk (to a multiple of 8) for tiny
    # batches so we never pad B by more than one tile.
    bb = min(_round_up(block_b, 8), _round_up(B, 8))
    B_pad = _round_up(B, bb)
    grid = (B_pad // bb,)

    def pad2(x, rows, cols):
        pr, pc = rows - x.shape[0], cols - x.shape[1]
        if pr or pc:
            x = jnp.pad(x, ((0, pr), (0, pc)))
        return x

    # Zero-padding is exact: padded state features hit padded (zero) weight
    # rows; padded hidden/output lanes get zero weight columns + zero bias.
    s_p = pad2(s, B_pad, s_pad).astype(mxu_dtype)
    w1_p = pad2(w1, s_pad, h_pad).astype(mxu_dtype)
    w2_p = pad2(w2, h_pad, h_pad).astype(mxu_dtype)
    w3_p = pad2(w3, h_pad, a_pad).astype(mxu_dtype)
    b1_p = pad2(b1, 1, h_pad).astype(jnp.float32)
    b2_p = pad2(b2, 1, h_pad).astype(jnp.float32)
    b3_p = pad2(b3, 1, a_pad).astype(jnp.float32)

    itemsize = lambda a: a.size * a.dtype.itemsize
    flops = 2 * B_pad * (s_pad * h_pad + h_pad * h_pad + h_pad * a_pad)
    bytes_accessed = (itemsize(s_p) + itemsize(w1_p) + itemsize(w2_p)
                      + itemsize(w3_p) + itemsize(b1_p) + itemsize(b2_p)
                      + itemsize(b3_p) + B_pad * a_pad * 4)
    cost = pl.CostEstimate(flops=flops, transcendentals=0,
                           bytes_accessed=bytes_accessed)

    # Weights/biases are small and constant across the grid (index_map -> (0,0)).
    # (Single-buffering them via pipeline_mode is a further minor VMEM saving,
    # skipped here since their footprint is < 100 KiB.)
    full = lambda r, c: pl.BlockSpec((r, c), lambda i: (0, 0))

    out = pl.pallas_call(
        _mlp_kernel,
        out_shape=jax.ShapeDtypeStruct((B_pad, a_pad), jnp.float32),
        grid_spec=pltpu.PrefetchScalarGridSpec(
            num_scalar_prefetch=0,
            grid=grid,
            in_specs=[
                pl.BlockSpec((bb, s_pad), lambda i: (i, 0)),  # state tile
                full(s_pad, h_pad),   # w1
                full(1, h_pad),       # b1
                full(h_pad, h_pad),   # w2
                full(1, h_pad),       # b2
                full(h_pad, a_pad),   # w3
                full(1, a_pad),       # b3
            ],
            out_specs=pl.BlockSpec((bb, a_pad), lambda i: (i, 0)),
        ),
        compiler_params=pltpu.CompilerParams(
            dimension_semantics=("parallel",)),
        cost_estimate=cost,
    )(s_p, w1_p, b1_p, w2_p, b2_p, w3_p, b3_p)

    return out[:B, :a_dim]


def init_params(key, s_dim, h_dim, a_dim):
    """Deterministic init mimicking nn.Linear's U(-1/sqrt(in), 1/sqrt(in)).

    Weights are stored [in_dim, out_dim] (transposed vs. PyTorch) so the kernel
    computes plain x @ W + b; biases are kept 2-D [1, out_dim].
    """
    ks = jax.random.split(key, 6)

    def lin(kw, kb, fan_in, fan_out):
        bound = 1.0 / jnp.sqrt(jnp.float32(fan_in))
        w = jax.random.uniform(kw, (fan_in, fan_out), jnp.float32, -bound, bound)
        b = jax.random.uniform(kb, (1, fan_out), jnp.float32, -bound, bound)
        return w, b

    w1, b1 = lin(ks[0], ks[1], s_dim, h_dim)
    w2, b2 = lin(ks[2], ks[3], h_dim, h_dim)
    w3, b3 = lin(ks[4], ks[5], h_dim, a_dim)
    return {"w1": w1, "b1": b1, "w2": w2, "b2": b2, "w3": w3, "b3": b3}


def reference_forward(s, p):
    h1 = jnp.maximum(s @ p["w1"] + p["b1"], 0.0)
    h2 = jnp.maximum(h1 @ p["w2"] + p["b2"], 0.0)
    return h2 @ p["w3"] + p["b3"]


if __name__ == "__main__":
    s_dim, h_dim, a_dim = 64, 32, 16
    batch = 10  # deliberately NOT a multiple of 8 to exercise batch padding

    key = jax.random.PRNGKey(0)
    k_s, k_p = jax.random.split(key)
    s = jax.random.normal(k_s, (batch, s_dim), jnp.float32)
    params = init_params(k_p, s_dim, h_dim, a_dim)

    ref = reference_forward(s, params)

    # Exact-f32 MXU path: tight tolerance.
    out_f32 = jax.block_until_ready(
        multi_discrete_policy_forward(s, params, mxu_dtype=jnp.float32))
    assert out_f32.shape == (batch, a_dim)
    assert jnp.allclose(out_f32, ref, atol=1e-5, rtol=1e-5), "f32 mismatch"

    # Default bf16-input MXU path (f32 accumulation): looser tolerance.
    out_bf16 = jax.block_until_ready(multi_discrete_policy_forward(s, params))
    assert out_bf16.shape == (batch, a_dim)
    assert jnp.allclose(out_bf16, ref, atol=3e-2, rtol=3e-2), "bf16 mismatch"

    print("KERNEL_OK")
</pallas_src>

<mosaic_0001>
module attributes {stable_mosaic.version = 11 : i64} {
  func.func @_mlp_kernel(%arg0: i32, %arg1: memref<16x128xf32, #tpu.memory_space<vmem>>, %arg2: memref<128x128xf32, #tpu.memory_space<vmem>>, %arg3: memref<1x128xf32, #tpu.memory_space<vmem>>, %arg4: memref<128x128xf32, #tpu.memory_space<vmem>>, %arg5: memref<1x128xf32, #tpu.memory_space<vmem>>, %arg6: memref<128x128xf32, #tpu.memory_space<vmem>>, %arg7: memref<1x128xf32, #tpu.memory_space<vmem>>, %arg8: memref<16x128xf32, #tpu.memory_space<vmem>>) attributes {dimension_semantics = [#tpu.dimension_semantics<parallel>], iteration_bounds = array<i64: 1>, scalar_prefetch = 0 : i64, scratch_operands = 0 : i64, tpu.core_type = #tpu.core_type<tc>, window_params = [{transform_indices = @transform_0, window_bounds = array<i64: 16, 128>}, {pipeline_mode = #tpu.pipeline_mode<synchronous>, transform_indices = @transform_1, window_bounds = array<i64: 128, 128>}, {pipeline_mode = #tpu.pipeline_mode<synchronous>, transform_indices = @transform_2, window_bounds = array<i64: 1, 128>}, {pipeline_mode = #tpu.pipeline_mode<synchronous>, transform_indices = @transform_3, window_bounds = array<i64: 128, 128>}, {pipeline_mode = #tpu.pipeline_mode<synchronous>, transform_indices = @transform_4, window_bounds = array<i64: 1, 128>}, {pipeline_mode = #tpu.pipeline_mode<synchronous>, transform_indices = @transform_5, window_bounds = array<i64: 128, 128>}, {pipeline_mode = #tpu.pipeline_mode<synchronous>, transform_indices = @transform_6, window_bounds = array<i64: 1, 128>}, {transform_indices = @transform_7, window_bounds = array<i64: 16, 128>}]} {
    %c0 = arith.constant 0 : index
    %c0_0 = arith.constant 0 : index
    %0 = vector.load %arg1[%c0, %c0_0] : memref<16x128xf32, #tpu.memory_space<vmem>>, vector<16x128xf32>
    %c0_1 = arith.constant 0 : index
    %c0_2 = arith.constant 0 : index
    %1 = vector.load %arg3[%c0_1, %c0_2] : memref<1x128xf32, #tpu.memory_space<vmem>>, vector<1x128xf32>
    %c0_3 = arith.constant 0 : index
    %c0_4 = arith.constant 0 : index
    %2 = vector.load %arg5[%c0_3, %c0_4] : memref<1x128xf32, #tpu.memory_space<vmem>>, vector<1x128xf32>
    %c0_5 = arith.constant 0 : index
    %c0_6 = arith.constant 0 : index
    %3 = vector.load %arg7[%c0_5, %c0_6] : memref<1x128xf32, #tpu.memory_space<vmem>>, vector<1x128xf32>
    %c0_7 = arith.constant 0 : index
    %c0_8 = arith.constant 0 : index
    %4 = vector.load %arg2[%c0_7, %c0_8] : memref<128x128xf32, #tpu.memory_space<vmem>>, vector<128x128xf32>
    %cst = arith.constant dense<0.000000e+00> : vector<16x128xf32>
    %5 = tpu.matmul %0, %4, %cst {dimension_numbers = #tpu.dot_dimension_numbers<[1], [0], [0], [1], [0, 0, 1, 1], [], []>} : vector<16x128xf32>, vector<128x128xf32>, vector<16x128xf32> -> vector<16x128xf32>
    %6 = vector.broadcast %1 : vector<1x128xf32> to vector<16x128xf32>
    %7 = arith.addf %5, %6 : vector<16x128xf32>
    %cst_9 = arith.constant 0.000000e+00 : f32
    %8 = vector.broadcast %cst_9 : f32 to vector<16x128xf32>
    %9 = arith.maximumf %7, %8 : vector<16x128xf32>
    %c0_10 = arith.constant 0 : index
    %c0_11 = arith.constant 0 : index
    %10 = vector.load %arg4[%c0_10, %c0_11] : memref<128x128xf32, #tpu.memory_space<vmem>>, vector<128x128xf32>
    %cst_12 = arith.constant dense<0.000000e+00> : vector<16x128xf32>
    %11 = tpu.matmul %9, %10, %cst_12 {dimension_numbers = #tpu.dot_dimension_numbers<[1], [0], [0], [1], [0, 0, 1, 1], [], []>} : vector<16x128xf32>, vector<128x128xf32>, vector<16x128xf32> -> vector<16x128xf32>
    %12 = vector.broadcast %2 : vector<1x128xf32> to vector<16x128xf32>
    %13 = arith.addf %11, %12 : vector<16x128xf32>
    %cst_13 = arith.constant 0.000000e+00 : f32
    %14 = vector.broadcast %cst_13 : f32 to vector<16x128xf32>
    %15 = arith.maximumf %13, %14 : vector<16x128xf32>
    %c0_14 = arith.constant 0 : index
    %c0_15 = arith.constant 0 : index
    %16 = vector.load %arg6[%c0_14, %c0_15] : memref<128x128xf32, #tpu.memory_space<vmem>>, vector<128x128xf32>
    %cst_16 = arith.constant dense<0.000000e+00> : vector<16x128xf32>
    %17 = tpu.matmul %15, %16, %cst_16 {dimension_numbers = #tpu.dot_dimension_numbers<[1], [0], [0], [1], [0, 0, 1, 1], [], []>} : vector<16x128xf32>, vector<128x128xf32>, vector<16x128xf32> -> vector<16x128xf32>
    %18 = vector.broadcast %3 : vector<1x128xf32> to vector<16x128xf32>
    %19 = arith.addf %17, %18 : vector<16x128xf32>
    %c0_17 = arith.constant 0 : index
    %c0_18 = arith.constant 0 : index
    %20 = vector.load %arg8[%c0_17, %c0_18] : memref<16x128xf32, #tpu.memory_space<vmem>>, vector<16x128xf32>
    tpu.vector_store %arg8[%c0_17, %c0_18], %19 {strides = array<i32>} : memref<16x128xf32, #tpu.memory_space<vmem>>, vector<16x128xf32>,
    return
  }
  func.func @transform_0(%arg0: i32) -> (i32, i32) {
    %c0_i32 = arith.constant 0 : i32
    %c0_i32_0 = arith.constant 0 : i32
    return %arg0, %c0_i32 : i32, i32
  }
  func.func @transform_1(%arg0: i32) -> (i32, i32) {
    %c0_i32 = arith.constant 0 : i32
    %c0_i32_0 = arith.constant 0 : i32
    %c0_i32_1 = arith.constant 0 : i32
    return %c0_i32, %c0_i32_0 : i32, i32
  }
  func.func @transform_2(%arg0: i32) -> (i32, i32) {
    %c0_i32 = arith.constant 0 : i32
    %c0_i32_0 = arith.constant 0 : i32
    %c0_i32_1 = arith.constant 0 : i32
    return %c0_i32, %c0_i32_0 : i32, i32
  }
  func.func @transform_3(%arg0: i32) -> (i32, i32) {
    %c0_i32 = arith.constant 0 : i32
    %c0_i32_0 = arith.constant 0 : i32
    %c0_i32_1 = arith.constant 0 : i32
    return %c0_i32, %c0_i32_0 : i32, i32
  }
  func.func @transform_4(%arg0: i32) -> (i32, i32) {
    %c0_i32 = arith.constant 0 : i32
    %c0_i32_0 = arith.constant 0 : i32
    %c0_i32_1 = arith.constant 0 : i32
    return %c0_i32, %c0_i32_0 : i32, i32
  }
  func.func @transform_5(%arg0: i32) -> (i32, i32) {
    %c0_i32 = arith.constant 0 : i32
    %c0_i32_0 = arith.constant 0 : i32
    %c0_i32_1 = arith.constant 0 : i32
    return %c0_i32, %c0_i32_0 : i32, i32
  }
  func.func @transform_6(%arg0: i32) -> (i32, i32) {
    %c0_i32 = arith.constant 0 : i32
    %c0_i32_0 = arith.constant 0 : i32
    %c0_i32_1 = arith.constant 0 : i32
    return %c0_i32, %c0_i32_0 : i32, i32
  }
  func.func @transform_7(%arg0: i32) -> (i32, i32) {
    %c0_i32 = arith.constant 0 : i32
    %c0_i32_0 = arith.constant 0 : i32
    return %arg0, %c0_i32 : i32, i32
  }
}

</mosaic_0001>

<llo_original>
// kernel: multi_discrete_policy_forward.1
$region0: #{multi_discrete_policy_forward.1}
  #allocation0 [shape = 'u32[]', space=smem, size = 0x4, offset = 0x4, fixed_abs, tag = 'smem constant byte address 0x4 - core index']
  #allocation1 [shape = 'u32[144,128]{1,0:T(1,128)}', space=vmem, size = 0x12000, scoped, tag = 'internal scratch']
  %s0 = inlined_call_operand.vmem [shape: f32[16,128], index: 0, kind: input, shape index: {}]
  %s1 = inlined_call_operand.vmem [shape: f32[128,128], index: 1, kind: input, shape index: {}]
  %s2 = inlined_call_operand.vmem [shape: f32[1,128], index: 2, kind: input, shape index: {}]
  %s3 = inlined_call_operand.vmem [shape: f32[128,128], index: 3, kind: input, shape index: {}]
  %s4 = inlined_call_operand.vmem [shape: f32[1,128], index: 4, kind: input, shape index: {}]
  %s5 = inlined_call_operand.vmem [shape: f32[128,128], index: 5, kind: input, shape index: {}]
  %s6 = inlined_call_operand.vmem [shape: f32[1,128], index: 6, kind: input, shape index: {}]
  %s7 = inlined_call_operand.hbm [shape: f32[16,128], index: 7, kind: output, shape index: {}]
  %s8 = sld [smem:[#allocation0]]
  $region38: #{multi_discrete_policy_forward.1} parent=0
    _
  %s10 = ssub.s32 1, %s8
  %s11 = scalar_select 0, %s10, %s8
  $region1: #{multi_discrete_policy_forward.1} parent=0
    #allocation2 [shape = 'u8[8192]{0}', space=vmem, size = 0x2000, scoped, tag = 'output window, operand 0, single buffered']
    #allocation3 [shape = 's32[1]{0}', space=sflag, size = 0x4, scoped, tag = 'scoped memory for multi_discrete_policy_forward.1']
    %12 = vsyncpa [#allocation3], 0
    // Predicated region
    $region2: #{multi_discrete_policy_forward.1} parent=1 // pred_check
      _
    $region3: #{multi_discrete_policy_forward.1} parent=1 // pred_check_branch
      %14 = sbr.rel (0) target = $region5
    $region4: #{multi_discrete_policy_forward.1} parent=1 // pred_region
      _
    $region5: #{multi_discrete_policy_forward.1} parent=1 // pred_fallthru
      _
    // Predicated region
    $region6: #{multi_discrete_policy_forward.1} parent=1 // pred_check
      _
    $region7: #{multi_discrete_policy_forward.1} parent=1 // pred_check_branch
      %16 = sbr.rel (0) target = $region9
    $region8: #{multi_discrete_policy_forward.1} parent=1 // pred_region
      _
    $region9: #{multi_discrete_policy_forward.1} parent=1 // pred_fallthru
      _
    // Predicated region
    $region10: #{multi_discrete_policy_forward.1} parent=1 // pred_check
      _
    $region11: #{multi_discrete_policy_forward.1} parent=1 // pred_check_branch
      %18 = sbr.rel (0) target = $region13
    $region12: #{multi_discrete_policy_forward.1} parent=1 // pred_region
      _
    $region13: #{multi_discrete_policy_forward.1} parent=1 // pred_fallthru
      _
    // Predicated region
    $region14: #{multi_discrete_policy_forward.1} parent=1 // pred_check
      _
    $region15: #{multi_discrete_policy_forward.1} parent=1 // pred_check_branch
      %20 = sbr.rel (0) target = $region17
    $region16: #{multi_discrete_policy_forward.1} parent=1 // pred_region
      _
    $region17: #{multi_discrete_policy_forward.1} parent=1 // pred_fallthru
      _
    // Predicated region
    $region18: #{multi_discrete_policy_forward.1} parent=1 // pred_check
      _
    $region19: #{multi_discrete_policy_forward.1} parent=1 // pred_check_branch
      %22 = sbr.rel (0) target = $region21
    $region20: #{multi_discrete_policy_forward.1} parent=1 // pred_region
      _
    $region21: #{multi_discrete_policy_forward.1} parent=1 // pred_fallthru
      _
    // Predicated region
    $region22: #{multi_discrete_policy_forward.1} parent=1 // pred_check
      _
    $region23: #{multi_discrete_policy_forward.1} parent=1 // pred_check_branch
      %24 = sbr.rel (0) target = $region25
    $region24: #{multi_discrete_policy_forward.1} parent=1 // pred_region
      _
    $region25: #{multi_discrete_policy_forward.1} parent=1 // pred_fallthru
      _
    // Predicated region
    $region26: #{multi_discrete_policy_forward.1} parent=1 // pred_check
      _
    $region27: #{multi_discrete_policy_forward.1} parent=1 // pred_check_branch
      %26 = sbr.rel (0) target = $region29
    $region28: #{multi_discrete_policy_forward.1} parent=1 // pred_region
      _
    $region29: #{multi_discrete_policy_forward.1} parent=1 // pred_fallthru
      _
    %v27 = vld [vmem:[%s0] sm:$0xff]
    %v28 = vld [vmem:[%s0 + $0x8] sm:$0xff]
    %v29 = vld [vmem:[%s2] sm:$0x1]
    %v30 = vld [vmem:[%s4] sm:$0x1]
    %v31 = vld [vmem:[%s6] sm:$0x1]
    %v32 = vld [vmem:[%s1] sm:$0xff]
    %v33 = vld [vmem:[%s1 + $0x8] sm:$0xff]
    %v34 = vld [vmem:[%s1 + $0x10] sm:$0xff]
    %v35 = vld [vmem:[%s1 + $0x18] sm:$0xff]
    %v36 = vld [vmem:[%s1 + $0x20] sm:$0xff]
    %v37 = vld [vmem:[%s1 + $0x28] sm:$0xff]
    %v38 = vld [vmem:[%s1 + $0x30] sm:$0xff]
    %v39 = vld [vmem:[%s1 + $0x38] sm:$0xff]
    %v40 = vld [vmem:[%s1 + $0x40] sm:$0xff]
    %v41 = vld [vmem:[%s1 + $0x48] sm:$0xff]
    %v42 = vld [vmem:[%s1 + $0x50] sm:$0xff]
    %v43 = vld [vmem:[%s1 + $0x58] sm:$0xff]
    %v44 = vld [vmem:[%s1 + $0x60] sm:$0xff]
    %v45 = vld [vmem:[%s1 + $0x68] sm:$0xff]
    %v46 = vld [vmem:[%s1 + $0x70] sm:$0xff]
    %v47 = vld [vmem:[%s1 + $0x78] sm:$0xff]
    %v49 = vlaneseq
    %v50 = vshrl.u32 %v49, 7
    %v51 = vsub.s32 0, %v50
    %v52 = vrot.slane %v29, %v51
    %54 = vmatprep.subr.mxu0 0.0
    %55 = vmatpush1.msra.mxu0 %v47
    %56 = vmatprep.subr.mxu0 0.0
    %57 = vmatpush1.msra.mxu0 %v46
    %58 = vmatprep.subr.mxu0 0.0
    %59 = vmatpush1.msra.mxu0 %v45
    %60 = vmatprep.subr.mxu0 0.0
    %61 = vmatpush1.msra.mxu0 %v44
    %62 = vmatprep.subr.mxu0 0.0
    %63 = vmatpush1.msra.mxu0 %v43
    %64 = vmatprep.subr.mxu0 0.0
    %65 = vmatpush1.msra.mxu0 %v42
    %66 = vmatprep.subr.mxu0 0.0
    %67 = vmatpush1.msra.mxu0 %v41
    %68 = vmatprep.subr.mxu0 0.0
    %69 = vmatpush1.msra.mxu0 %v40
    %70 = vmatprep.subr.mxu0 0.0
    %71 = vmatpush1.msra.mxu0 %v39
    %72 = vmatprep.subr.mxu0 0.0
    %73 = vmatpush1.msra.mxu0 %v38
    %74 = vmatprep.subr.mxu0 0.0
    %75 = vmatpush1.msra.mxu0 %v37
    %76 = vmatprep.subr.mxu0 0.0
    %77 = vmatpush1.msra.mxu0 %v36
    %78 = vmatprep.subr.mxu0 0.0
    %79 = vmatpush1.msra.mxu0 %v35
    %80 = vmatprep.subr.mxu0 0.0
    %81 = vmatpush1.msra.mxu0 %v34
    %82 = vmatprep.subr.mxu0 0.0
    %83 = vmatpush1.msra.mxu0 %v33
    %84 = vmatprep.subr.mxu0 0.0
    %85 = vmatpush1.msra.mxu0 %v32
    %86 = vmatprep.subr.mxu0 0.0
    %87 = vmatpush2.msra.mxu0 0.0
    %88 = vmatprep.subr.mxu0 0.0
    %89 = vmatpush2.msra.mxu0 0.0
    %90 = vmatprep.subr.mxu0 0.0
    %91 = vmatpush2.msra.mxu0 0.0
    %92 = vmatprep.subr.mxu0 0.0
    %93 = vmatpush2.msra.mxu0 0.0
    %94 = vmatprep.subr.mxu0 0.0
    %95 = vmatpush2.msra.mxu0 0.0
    %96 = vmatprep.subr.mxu0 0.0
    %97 = vmatpush2.msra.mxu0 0.0
    %98 = vmatprep.subr.mxu0 0.0
    %99 = vmatpush2.msra.mxu0 0.0
    %100 = vmatprep.subr.mxu0 0.0
    %101 = vmatpush2.msra.mxu0 0.0
    %102 = vmatprep.subr.mxu0 0.0
    %103 = vmatpush2.msra.mxu0 0.0
    %104 = vmatprep.subr.mxu0 0.0
    %105 = vmatpush2.msra.mxu0 0.0
    %106 = vmatprep.subr.mxu0 0.0
    %107 = vmatpush2.msra.mxu0 0.0
    %108 = vmatprep.subr.mxu0 0.0
    %109 = vmatpush2.msra.mxu0 0.0
    %110 = vmatprep.subr.mxu0 0.0
    %111 = vmatpush2.msra.mxu0 0.0
    %112 = vmatprep.subr.mxu0 0.0
    %113 = vmatpush2.msra.mxu0 0.0
    %114 = vmatprep.subr.mxu0 0.0
    %115 = vmatpush2.msra.mxu0 0.0
    %116 = vmatprep.subr.mxu0 0.0
    %117 = vmatpush2.msra.mxu0 0.0
    %118 = vmatprep.mubr.f32.mxu0 0.0
    %119 = vmatmul.mubr.f32.gmra.mxu0 %v27
    %v120 = vpop.f32.mrf.mxu0
    %v121 = vadd.f32 %v52, %v120
    %v122 = vpop.f32.mrf.mxu0
    %123 = vmatprep.mubr.f32.mxu0 0.0
    %124 = vmatmul.mubr.f32.gmra.mxu0 %v28
    %v125 = vpop.f32.mrf.mxu0
    %v126 = vadd.f32 %v52, %v125
    %v127 = vpop.f32.mrf.mxu0
    %128 = vdwg.mxu0
    %v129 = vmax.f32 %v121, 0.0
    %v130 = vmax.f32 %v126, 0.0
    %v131 = vld [vmem:[%s3] sm:$0xff]
    %v132 = vld [vmem:[%s3 + $0x8] sm:$0xff]
    %v133 = vld [vmem:[%s3 + $0x10] sm:$0xff]
    %v134 = vld [vmem:[%s3 + $0x18] sm:$0xff]
    %v135 = vld [vmem:[%s3 + $0x20] sm:$0xff]
    %v136 = vld [vmem:[%s3 + $0x28] sm:$0xff]
    %v137 = vld [vmem:[%s3 + $0x30] sm:$0xff]
    %v138 = vld [vmem:[%s3 + $0x38] sm:$0xff]
    %v139 = vld [vmem:[%s3 + $0x40] sm:$0xff]
    %v140 = vld [vmem:[%s3 + $0x48] sm:$0xff]
    %v141 = vld [vmem:[%s3 + $0x50] sm:$0xff]
    %v142 = vld [vmem:[%s3 + $0x58] sm:$0xff]
    %v143 = vld [vmem:[%s3 + $0x60] sm:$0xff]
    %v144 = vld [vmem:[%s3 + $0x68] sm:$0xff]
    %v145 = vld [vmem:[%s3 + $0x70] sm:$0xff]
    %v146 = vld [vmem:[%s3 + $0x78] sm:$0xff]
    %v148 = vlaneseq
    %v149 = vshrl.u32 %v148, 7
    %v150 = vsub.s32 0, %v149
    %v151 = vrot.slane %v30, %v150
    %153 = vmatprep.subr.mxu0 0.0
    %154 = vmatpush1.msra.mxu0 %v146
    %155 = vmatprep.subr.mxu0 0.0
    %156 = vmatpush1.msra.mxu0 %v145
    %157 = vmatprep.subr.mxu0 0.0
    %158 = vmatpush1.msra.mxu0 %v144
    %159 = vmatprep.subr.mxu0 0.0
    %160 = vmatpush1.msra.mxu0 %v143
    %161 = vmatprep.subr.mxu0 0.0
    %162 = vmatpush1.msra.mxu0 %v142
    %163 = vmatprep.subr.mxu0 0.0
    %164 = vmatpush1.msra.mxu0 %v141
    %165 = vmatprep.subr.mxu0 0.0
    %166 = vmatpush1.msra.mxu0 %v140
    %167 = vmatprep.subr.mxu0 0.0
    %168 = vmatpush1.msra.mxu0 %v139
    %169 = vmatprep.subr.mxu0 0.0
    %170 = vmatpush1.msra.mxu0 %v138
    %171 = vmatprep.subr.mxu0 0.0
    %172 = vmatpush1.msra.mxu0 %v137
    %173 = vmatprep.subr.mxu0 0.0
    %174 = vmatpush1.msra.mxu0 %v136
    %175 = vmatprep.subr.mxu0 0.0
    %176 = vmatpush1.msra.mxu0 %v135
    %177 = vmatprep.subr.mxu0 0.0
    %178 = vmatpush1.msra.mxu0 %v134
    %179 = vmatprep.subr.mxu0 0.0
    %180 = vmatpush1.msra.mxu0 %v133
    %181 = vmatprep.subr.mxu0 0.0
    %182 = vmatpush1.msra.mxu0 %v132
    %183 = vmatprep.subr.mxu0 0.0
    %184 = vmatpush1.msra.mxu0 %v131
    %185 = vmatprep.subr.mxu0 0.0
    %186 = vmatpush2.msra.mxu0 0.0
    %187 = vmatprep.subr.mxu0 0.0
    %188 = vmatpush2.msra.mxu0 0.0
    %189 = vmatprep.subr.mxu0 0.0
    %190 = vmatpush2.msra.mxu0 0.0
    %191 = vmatprep.subr.mxu0 0.0
    %192 = vmatpush2.msra.mxu0 0.0
    %193 = vmatprep.subr.mxu0 0.0
    %194 = vmatpush2.msra.mxu0 0.0
    %195 = vmatprep.subr.mxu0 0.0
    %196 = vmatpush2.msra.mxu0 0.0
    %197 = vmatprep.subr.mxu0 0.0
    %198 = vmatpush2.msra.mxu0 0.0
    %199 = vmatprep.subr.mxu0 0.0
    %200 = vmatpush2.msra.mxu0 0.0
    %201 = vmatprep.subr.mxu0 0.0
    %202 = vmatpush2.msra.mxu0 0.0
    %203 = vmatprep.subr.mxu0 0.0
    %204 = vmatpush2.msra.mxu0 0.0
    %205 = vmatprep.subr.mxu0 0.0
    %206 = vmatpush2.msra.mxu0 0.0
    %207 = vmatprep.subr.mxu0 0.0
    %208 = vmatpush2.msra.mxu0 0.0
    %209 = vmatprep.subr.mxu0 0.0
    %210 = vmatpush2.msra.mxu0 0.0
    %211 = vmatprep.subr.mxu0 0.0
    %212 = vmatpush2.msra.mxu0 0.0
    %213 = vmatprep.subr.mxu0 0.0
    %214 = vmatpush2.msra.mxu0 0.0
    %215 = vmatprep.subr.mxu0 0.0
    %216 = vmatpush2.msra.mxu0 0.0
    %217 = vmatprep.mubr.f32.mxu0 0.0
    %218 = vmatmul.mubr.f32.gmra.mxu0 %v129
    %v219 = vpop.f32.mrf.mxu0
    %v220 = vadd.f32 %v151, %v219
    %v221 = vpop.f32.mrf.mxu0
    %222 = vmatprep.mubr.f32.mxu0 0.0
    %223 = vmatmul.mubr.f32.gmra.mxu0 %v130
    %v224 = vpop.f32.mrf.mxu0
    %v225 = vadd.f32 %v151, %v224
    %v226 = vpop.f32.mrf.mxu0
    %227 = vdwg.mxu0
    %v228 = vmax.f32 %v220, 0.0
    %v229 = vmax.f32 %v225, 0.0
    %v230 = vld [vmem:[%s5] sm:$0xff]
    %v231 = vld [vmem:[%s5 + $0x8] sm:$0xff]
    %v232 = vld [vmem:[%s5 + $0x10] sm:$0xff]
    %v233 = vld [vmem:[%s5 + $0x18] sm:$0xff]
    %v234 = vld [vmem:[%s5 + $0x20] sm:$0xff]
    %v235 = vld [vmem:[%s5 + $0x28] sm:$0xff]
    %v236 = vld [vmem:[%s5 + $0x30] sm:$0xff]
    %v237 = vld [vmem:[%s5 + $0x38] sm:$0xff]
    %v238 = vld [vmem:[%s5 + $0x40] sm:$0xff]
    %v239 = vld [vmem:[%s5 + $0x48] sm:$0xff]
    %v240 = vld [vmem:[%s5 + $0x50] sm:$0xff]
    %v241 = vld [vmem:[%s5 + $0x58] sm:$0xff]
    %v242 = vld [vmem:[%s5 + $0x60] sm:$0xff]
    %v243 = vld [vmem:[%s5 + $0x68] sm:$0xff]
    %v244 = vld [vmem:[%s5 + $0x70] sm:$0xff]
    %v245 = vld [vmem:[%s5 + $0x78] sm:$0xff]
    %v247 = vlaneseq
    %v248 = vshrl.u32 %v247, 7
    %v249 = vsub.s32 0, %v248
    %v250 = vrot.slane %v31, %v249
    %252 = vmatprep.subr.mxu0 0.0
    %253 = vmatpush1.msra.mxu0 %v245
    %254 = vmatprep.subr.mxu0 0.0
    %255 = vmatpush1.msra.mxu0 %v244
    %256 = vmatprep.subr.mxu0 0.0
    %257 = vmatpush1.msra.mxu0 %v243
    %258 = vmatprep.subr.mxu0 0.0
    %259 = vmatpush1.msra.mxu0 %v242
    %260 = vmatprep.subr.mxu0 0.0
    %261 = vmatpush1.msra.mxu0 %v241
    %262 = vmatprep.subr.mxu0 0.0
    %263 = vmatpush1.msra.mxu0 %v240
    %264 = vmatprep.subr.mxu0 0.0
    %265 = vmatpush1.msra.mxu0 %v239
    %266 = vmatprep.subr.mxu0 0.0
    %267 = vmatpush1.msra.mxu0 %v238
    %268 = vmatprep.subr.mxu0 0.0
    %269 = vmatpush1.msra.mxu0 %v237
    %270 = vmatprep.subr.mxu0 0.0
    %271 = vmatpush1.msra.mxu0 %v236
    %272 = vmatprep.subr.mxu0 0.0
    %273 = vmatpush1.msra.mxu0 %v235
    %274 = vmatprep.subr.mxu0 0.0
    %275 = vmatpush1.msra.mxu0 %v234
    %276 = vmatprep.subr.mxu0 0.0
    %277 = vmatpush1.msra.mxu0 %v233
    %278 = vmatprep.subr.mxu0 0.0
    %279 = vmatpush1.msra.mxu0 %v232
    %280 = vmatprep.subr.mxu0 0.0
    %281 = vmatpush1.msra.mxu0 %v231
    %282 = vmatprep.subr.mxu0 0.0
    %283 = vmatpush1.msra.mxu0 %v230
    %284 = vmatprep.subr.mxu0 0.0
    %285 = vmatpush2.msra.mxu0 0.0
    %286 = vmatprep.subr.mxu0 0.0
    %287 = vmatpush2.msra.mxu0 0.0
    %288 = vmatprep.subr.mxu0 0.0
    %289 = vmatpush2.msra.mxu0 0.0
    %290 = vmatprep.subr.mxu0 0.0
    %291 = vmatpush2.msra.mxu0 0.0
    %292 = vmatprep.subr.mxu0 0.0
    %293 = vmatpush2.msra.mxu0 0.0
    %294 = vmatprep.subr.mxu0 0.0
    %295 = vmatpush2.msra.mxu0 0.0
    %296 = vmatprep.subr.mxu0 0.0
    %297 = vmatpush2.msra.mxu0 0.0
    %298 = vmatprep.subr.mxu0 0.0
    %299 = vmatpush2.msra.mxu0 0.0
    %300 = vmatprep.subr.mxu0 0.0
    %301 = vmatpush2.msra.mxu0 0.0
    %302 = vmatprep.subr.mxu0 0.0
    %303 = vmatpush2.msra.mxu0 0.0
    %304 = vmatprep.subr.mxu0 0.0
    %305 = vmatpush2.msra.mxu0 0.0
    %306 = vmatprep.subr.mxu0 0.0
    %307 = vmatpush2.msra.mxu0 0.0
    %308 = vmatprep.subr.mxu0 0.0
    %309 = vmatpush2.msra.mxu0 0.0
    %310 = vmatprep.subr.mxu0 0.0
    %311 = vmatpush2.msra.mxu0 0.0
    %312 = vmatprep.subr.mxu0 0.0
    %313 = vmatpush2.msra.mxu0 0.0
    %314 = vmatprep.subr.mxu0 0.0
    %315 = vmatpush2.msra.mxu0 0.0
    %316 = vmatprep.mubr.f32.mxu0 0.0
    %317 = vmatmul.mubr.f32.gmra.mxu0 %v228
    %v318 = vpop.f32.mrf.mxu0
    %v319 = vadd.f32 %v250, %v318
    %v320 = vpop.f32.mrf.mxu0
    %321 = vmatprep.mubr.f32.mxu0 0.0
    %322 = vmatmul.mubr.f32.gmra.mxu0 %v229
    %v323 = vpop.f32.mrf.mxu0
    %v324 = vadd.f32 %v250, %v323
    %v325 = vpop.f32.mrf.mxu0
    %326 = vdwg.mxu0
    %327 = vst [vmem:[#allocation2] sm:$0xff] %v319
    %328 = vst [vmem:[#allocation2 + $0x8] sm:$0xff] %v324
    // Predicated region
    $region30: #{multi_discrete_policy_forward.1} parent=1 // pred_check
      _
    $region31: #{multi_discrete_policy_forward.1} parent=1 // pred_check_branch
      %330 = sbr.rel (0) target = $region33
    $region32: #{multi_discrete_policy_forward.1} parent=1 // pred_region
      %s332 = ssub.s32 256, 256
      %333 = vsyncadd [#allocation3], %s332
      %s334 = sshll.u32 [#allocation2], 4
      %s335 = int_to_ptr.vmem [resolvable:$true] %s334
      %340 = dma.vmem_to_hbm [thread:$0]  %s335, 256, %s7, [#allocation3], 128, 128, 8
    $region33: #{multi_discrete_policy_forward.1} parent=1 // pred_fallthru
      _
    // Predicated region
    $region34: #{multi_discrete_policy_forward.1} parent=1 // pred_check
      _
    $region35: #{multi_discrete_policy_forward.1} parent=1 // pred_check_branch
      %342 = sbr.rel (0) target = $region37
    $region36: #{multi_discrete_policy_forward.1} parent=1 // pred_region
      %343 = dma.done [#allocation3], 256
    $region37: #{multi_discrete_policy_forward.1} parent=1 // pred_fallthru
      _
    %344 = vsyncpa [#allocation3], 1

</llo_original>
